<compile_context>
chip_gen: v7x
topology: tpu7x:2x2x1
jax: 0.10.0
libtpu: 0.0.40
codegen_flags: <defaults>
</compile_context>

<pallas_src>
import functools

import jax
import jax.numpy as jnp
from jax.experimental import pallas as pl
from jax.experimental.pallas import tpu as pltpu

IN_FEATURES = 28 * 28      # 784
HIDDEN = 16 * 16           # 256
OUT_FEATURES = 10
OUT_PAD = 128              # lane-dense output width
SUBLANE_BF16 = 16          # bf16 sublane tile (packed pairs)
MAX_TM = 256               # batch tile for the grid


def mlp_kernel(x_ref, w1_ref, b1_ref, w2_ref, b2_ref, o_ref):
    # fc1: [TM, 784]bf16 @ [784, 256]bf16 -> f32 accum (MXU)
    h = jnp.dot(x_ref[...], w1_ref[...], preferred_element_type=jnp.float32)
    # bias + ReLU in f32 (VPU)
    h = jnp.maximum(h + b1_ref[...], 0.0)
    # fc2: [TM, 256]bf16 @ [256, 128]bf16 -> f32 accum (MXU)
    z = jnp.dot(h.astype(jnp.bfloat16), w2_ref[...],
                preferred_element_type=jnp.float32)
    z = z + b2_ref[...]
    # Sigmoid: exp on EUP, approx reciprocal on EUP (VALU slot stays free).
    e = jnp.exp(-z)
    o_ref[...] = pl.reciprocal(1.0 + e, approx=True).astype(o_ref.dtype)


def prepare_params(w1, b1, w2, b2):
    """One-time (hoisted) weight prep: transpose to [in, out], cast to bf16,
    pad fc2 to a lane-dense 128-wide output slab."""
    w1_t = w1.T.astype(jnp.bfloat16)                                  # [784, 256]
    b1_2d = b1.reshape(1, HIDDEN).astype(jnp.float32)                 # [1, 256]
    w2_t = jnp.zeros((HIDDEN, OUT_PAD), jnp.bfloat16)
    w2_t = w2_t.at[:, :OUT_FEATURES].set(w2.T.astype(jnp.bfloat16))   # [256, 128]
    b2_2d = jnp.zeros((1, OUT_PAD), jnp.float32)
    b2_2d = b2_2d.at[:, :OUT_FEATURES].set(b2.astype(jnp.float32))    # [1, 128]
    return w1_t, b1_2d, w2_t, b2_2d


def _tiling(batch):
    """Pick batch tile TM and padded batch.  Small batches get one tile
    rounded to the bf16 sublane (16); large batches tile by MAX_TM."""
    b16 = max(SUBLANE_BF16, ((batch + SUBLANE_BF16 - 1) // SUBLANE_BF16)
              * SUBLANE_BF16)
    if b16 <= MAX_TM:
        return b16, b16
    b_pad = ((batch + MAX_TM - 1) // MAX_TM) * MAX_TM
    return MAX_TM, b_pad


@functools.partial(jax.jit, static_argnames=())
def mlp_forward(x, params):
    """x: any shape with leading batch dim (flattened like x.view(B, -1)).
    params: output of prepare_params (pre-transposed / padded weights)."""
    w1_t, b1_2d, w2_t, b2_2d = params
    B = x.shape[0]
    x2d = x.reshape(B, -1)
    assert x2d.shape[1] == IN_FEATURES

    tm, b_pad = _tiling(B)
    grid = (pl.cdiv(b_pad, tm),)

    # Pad batch to a full grid of bf16-sublane-aligned tiles, cast to bf16.
    x_padded = jnp.pad(x2d.astype(jnp.bfloat16), ((0, b_pad - B), (0, 0)))

    bytes_accessed = (
        x_padded.size * 2 + w1_t.size * 2 + b1_2d.size * 4
        + w2_t.size * 2 + b2_2d.size * 4 + b_pad * OUT_PAD * 4)
    cost = pl.CostEstimate(
        flops=2 * b_pad * IN_FEATURES * HIDDEN + 2 * b_pad * HIDDEN * OUT_PAD,
        transcendentals=2 * b_pad * OUT_PAD,   # exp + reciprocal
        bytes_accessed=bytes_accessed,
    )

    out_pad = pl.pallas_call(
        mlp_kernel,
        out_shape=jax.ShapeDtypeStruct((b_pad, OUT_PAD), jnp.float32),
        grid=grid,
        in_specs=[
            pl.BlockSpec((tm, IN_FEATURES), lambda i: (i, 0)),   # x tile
            pl.BlockSpec((IN_FEATURES, HIDDEN), lambda i: (0, 0)),  # w1 resident
            pl.BlockSpec((1, HIDDEN), lambda i: (0, 0)),             # b1 resident
            pl.BlockSpec((HIDDEN, OUT_PAD), lambda i: (0, 0)),       # w2 resident
            pl.BlockSpec((1, OUT_PAD), lambda i: (0, 0)),            # b2 resident
        ],
        out_specs=pl.BlockSpec((tm, OUT_PAD), lambda i: (i, 0)),
        compiler_params=pltpu.CompilerParams(
            dimension_semantics=("parallel",)),
        cost_estimate=cost,
    )(x_padded, w1_t, b1_2d, w2_t, b2_2d)

    # NOTE: padded rows / lanes 10..127 hold sigmoid(bias) garbage; anything
    # consuming this output (e.g. a fused loss) must keep this slice.
    return out_pad[:B, :OUT_FEATURES]


def init_params(key):
    """Deterministic parameter init (uniform, like PyTorch's default scale).
    Returned in PyTorch layout: W as (out, in), b as (out,)."""
    k1, k2, k3, k4 = jax.random.split(key, 4)
    bound1 = 1.0 / (IN_FEATURES ** 0.5)
    bound2 = 1.0 / (HIDDEN ** 0.5)
    w1 = jax.random.uniform(k1, (HIDDEN, IN_FEATURES), jnp.float32,
                            minval=-bound1, maxval=bound1)
    b1 = jax.random.uniform(k2, (HIDDEN,), jnp.float32,
                            minval=-bound1, maxval=bound1)
    w2 = jax.random.uniform(k3, (OUT_FEATURES, HIDDEN), jnp.float32,
                            minval=-bound2, maxval=bound2)
    b2 = jax.random.uniform(k4, (OUT_FEATURES,), jnp.float32,
                            minval=-bound2, maxval=bound2)
    return w1, b1, w2, b2


if __name__ == "__main__":
    key = jax.random.PRNGKey(0)
    kx, kp = jax.random.split(key)

    # MNIST-like input: [batch, channels, H, W] = [2, 1, 28, 28]
    x = jax.random.normal(kx, (2, 1, 28, 28), dtype=jnp.float32)
    w1, b1, w2, b2 = init_params(kp)

    params = prepare_params(w1, b1, w2, b2)   # hoisted out of the hot path
    out = mlp_forward(x, params)              # jit: pad + kernel + slice fused
    out = jax.block_until_ready(out)
    assert out.shape == (2, OUT_FEATURES)

    # Reference 1: pure f32 PyTorch-equivalent forward (loose tol: bf16 operands).
    x2d = x.reshape(x.shape[0], -1)
    ref_f32 = jax.nn.sigmoid(jnp.maximum(x2d @ w1.T + b1, 0.0) @ w2.T + b2)
    assert jnp.allclose(out, ref_f32, atol=2e-2, rtol=2e-2)

    # Reference 2: bf16-operand-mirrored forward (tight tol).
    xb = x2d.astype(jnp.bfloat16).astype(jnp.float32)
    w1b = w1.astype(jnp.bfloat16).astype(jnp.float32)
    w2b = w2.astype(jnp.bfloat16).astype(jnp.float32)
    hb = jnp.maximum(xb @ w1b.T + b1, 0.0)
    hb = hb.astype(jnp.bfloat16).astype(jnp.float32)
    ref_bf16 = jax.nn.sigmoid(hb @ w2b.T + b2)
    assert jnp.allclose(out, ref_bf16, atol=5e-3, rtol=5e-3)

    # Exercise a multi-tile grid (batch > MAX_TM) once to validate the tiling.
    xl = jax.random.normal(kx, (300, 1, 28, 28), dtype=jnp.float32)
    out_l = jax.block_until_ready(mlp_forward(xl, params))
    xl2d = xl.reshape(300, -1)
    ref_l = jax.nn.sigmoid(jnp.maximum(xl2d @ w1.T + b1, 0.0) @ w2.T + b2)
    assert out_l.shape == (300, OUT_FEATURES)
    assert jnp.allclose(out_l, ref_l, atol=2e-2, rtol=2e-2)

    print("KERNEL_OK")
</pallas_src>

<mosaic_0001>
module attributes {stable_mosaic.version = 11 : i64} {
  func.func @mlp_kernel(%arg0: i32, %arg1: memref<16x784xbf16, #tpu.memory_space<vmem>>, %arg2: memref<784x256xbf16, #tpu.memory_space<vmem>>, %arg3: memref<1x256xf32, #tpu.memory_space<vmem>>, %arg4: memref<256x128xbf16, #tpu.memory_space<vmem>>, %arg5: memref<1x128xf32, #tpu.memory_space<vmem>>, %arg6: memref<16x128xf32, #tpu.memory_space<vmem>>) attributes {dimension_semantics = [#tpu.dimension_semantics<parallel>], iteration_bounds = array<i64: 1>, scalar_prefetch = 0 : i64, scratch_operands = 0 : i64, tpu.core_type = #tpu.core_type<tc>, window_params = [{transform_indices = @transform_0, window_bounds = array<i64: 16, 784>}, {pipeline_mode = #tpu.pipeline_mode<synchronous>, transform_indices = @transform_1, window_bounds = array<i64: 784, 256>}, {pipeline_mode = #tpu.pipeline_mode<synchronous>, transform_indices = @transform_2, window_bounds = array<i64: 1, 256>}, {pipeline_mode = #tpu.pipeline_mode<synchronous>, transform_indices = @transform_3, window_bounds = array<i64: 256, 128>}, {pipeline_mode = #tpu.pipeline_mode<synchronous>, transform_indices = @transform_4, window_bounds = array<i64: 1, 128>}, {transform_indices = @transform_5, window_bounds = array<i64: 16, 128>}]} {
    %c0 = arith.constant 0 : index
    %c0_0 = arith.constant 0 : index
    %0 = vector.load %arg1[%c0, %c0_0] : memref<16x784xbf16, #tpu.memory_space<vmem>>, vector<16x784xbf16>
    %c0_1 = arith.constant 0 : index
    %c0_2 = arith.constant 0 : index
    %1 = vector.load %arg2[%c0_1, %c0_2] : memref<784x256xbf16, #tpu.memory_space<vmem>>, vector<784x256xbf16>
    %cst = arith.constant dense<0.000000e+00> : vector<16x256xf32>
    %2 = tpu.matmul %0, %1, %cst {dimension_numbers = #tpu.dot_dimension_numbers<[1], [0], [0], [1], [0, 0, 1, 1], [], []>} : vector<16x784xbf16>, vector<784x256xbf16>, vector<16x256xf32> -> vector<16x256xf32>
    %c0_3 = arith.constant 0 : index
    %c0_4 = arith.constant 0 : index
    %3 = vector.load %arg3[%c0_3, %c0_4] : memref<1x256xf32, #tpu.memory_space<vmem>>, vector<1x256xf32>
    %4 = vector.broadcast %3 : vector<1x256xf32> to vector<16x256xf32>
    %5 = arith.addf %2, %4 : vector<16x256xf32>
    %cst_5 = arith.constant 0.000000e+00 : f32
    %6 = vector.broadcast %cst_5 : f32 to vector<16x256xf32>
    %7 = arith.maximumf %5, %6 : vector<16x256xf32>
    %8 = arith.truncf %7 : vector<16x256xf32> to vector<16x256xbf16>
    %c0_6 = arith.constant 0 : index
    %c0_7 = arith.constant 0 : index
    %9 = vector.load %arg4[%c0_6, %c0_7] : memref<256x128xbf16, #tpu.memory_space<vmem>>, vector<256x128xbf16>
    %cst_8 = arith.constant dense<0.000000e+00> : vector<16x128xf32>
    %10 = tpu.matmul %8, %9, %cst_8 {dimension_numbers = #tpu.dot_dimension_numbers<[1], [0], [0], [1], [0, 0, 1, 1], [], []>} : vector<16x256xbf16>, vector<256x128xbf16>, vector<16x128xf32> -> vector<16x128xf32>
    %c0_9 = arith.constant 0 : index
    %c0_10 = arith.constant 0 : index
    %11 = vector.load %arg5[%c0_9, %c0_10] : memref<1x128xf32, #tpu.memory_space<vmem>>, vector<1x128xf32>
    %12 = vector.broadcast %11 : vector<1x128xf32> to vector<16x128xf32>
    %13 = arith.addf %10, %12 : vector<16x128xf32>
    %cst_11 = arith.constant 0.000000e+00 : f32
    %14 = vector.broadcast %cst_11 : f32 to vector<16x128xf32>
    %15 = arith.subf %14, %13 : vector<16x128xf32>
    %16 = math.exp %15 : vector<16x128xf32>
    %cst_12 = arith.constant 1.000000e+00 : f32
    %17 = vector.broadcast %cst_12 : f32 to vector<16x128xf32>
    %18 = arith.addf %17, %16 : vector<16x128xf32>
    %19 = tpu.reciprocal %18 {approx = true} : vector<16x128xf32> -> vector<16x128xf32>
    %c0_13 = arith.constant 0 : index
    %c0_14 = arith.constant 0 : index
    %20 = vector.load %arg6[%c0_13, %c0_14] : memref<16x128xf32, #tpu.memory_space<vmem>>, vector<16x128xf32>
    tpu.vector_store %arg6[%c0_13, %c0_14], %19 {strides = array<i32>} : memref<16x128xf32, #tpu.memory_space<vmem>>, vector<16x128xf32>,
    return
  }
  func.func @transform_0(%arg0: i32) -> (i32, i32) {
    %c0_i32 = arith.constant 0 : i32
    %c0_i32_0 = arith.constant 0 : i32
    return %arg0, %c0_i32 : i32, i32
  }
  func.func @transform_1(%arg0: i32) -> (i32, i32) {
    %c0_i32 = arith.constant 0 : i32
    %c0_i32_0 = arith.constant 0 : i32
    %c0_i32_1 = arith.constant 0 : i32
    return %c0_i32, %c0_i32_0 : i32, i32
  }
  func.func @transform_2(%arg0: i32) -> (i32, i32) {
    %c0_i32 = arith.constant 0 : i32
    %c0_i32_0 = arith.constant 0 : i32
    %c0_i32_1 = arith.constant 0 : i32
    return %c0_i32, %c0_i32_0 : i32, i32
  }
  func.func @transform_3(%arg0: i32) -> (i32, i32) {
    %c0_i32 = arith.constant 0 : i32
    %c0_i32_0 = arith.constant 0 : i32
    %c0_i32_1 = arith.constant 0 : i32
    return %c0_i32, %c0_i32_0 : i32, i32
  }
  func.func @transform_4(%arg0: i32) -> (i32, i32) {
    %c0_i32 = arith.constant 0 : i32
    %c0_i32_0 = arith.constant 0 : i32
    %c0_i32_1 = arith.constant 0 : i32
    return %c0_i32, %c0_i32_0 : i32, i32
  }
  func.func @transform_5(%arg0: i32) -> (i32, i32) {
    %c0_i32 = arith.constant 0 : i32
    %c0_i32_0 = arith.constant 0 : i32
    return %arg0, %c0_i32 : i32, i32
  }
}

</mosaic_0001>

<llo_original>
// kernel: mlp_forward.1
$region0: #{mlp_forward.1}
  #allocation0 [shape = 'u32[]', space=smem, size = 0x4, offset = 0x4, fixed_abs, tag = 'smem constant byte address 0x4 - core index']
  #allocation1 [shape = 'u32[144,128]{1,0:T(1,128)}', space=vmem, size = 0x12000, scoped, tag = 'internal scratch']
  %s0 = inlined_call_operand.vmem [shape: bf16[16,784], index: 0, kind: input, shape index: {}]
  %s1 = inlined_call_operand.hbm [shape: bf16[784,256], index: 1, kind: input, shape index: {}]
  %s2 = inlined_call_operand.vmem [shape: f32[1,256], index: 2, kind: input, shape index: {}]
  %s3 = inlined_call_operand.vmem [shape: bf16[256,128], index: 3, kind: input, shape index: {}]
  %s4 = inlined_call_operand.vmem [shape: f32[1,128], index: 4, kind: input, shape index: {}]
  %s5 = inlined_call_operand.vmem [shape: f32[16,128], index: 5, kind: output, shape index: {}]
  %s6 = sld [smem:[#allocation0]]
  $region34: #{mlp_forward.1} parent=0
    _
  %s8 = ssub.s32 1, %s6
  %s9 = scalar_select 0, %s8, %s6
  $region1: #{mlp_forward.1} parent=0
    #allocation2 [shape = 'u8[401408]{0}', space=vmem, size = 0x62000, scoped, tag = 'input window, operand 1, single buffered']
    #allocation3 [shape = 's32[1]{0}', space=sflag, size = 0x4, scoped, tag = 'scoped memory for mlp_forward.1']
    %10 = vsyncpa [#allocation3], 0
    // Predicated region
    $region2: #{mlp_forward.1} parent=1 // pred_check
      _
    $region3: #{mlp_forward.1} parent=1 // pred_check_branch
      %12 = sbr.rel (0) target = $region5
    $region4: #{mlp_forward.1} parent=1 // pred_region
      _
    $region5: #{mlp_forward.1} parent=1 // pred_fallthru
      _
    // Predicated region
    $region6: #{mlp_forward.1} parent=1 // pred_check
      _
    $region7: #{mlp_forward.1} parent=1 // pred_check_branch
      %14 = sbr.rel (0) target = $region9
    $region8: #{mlp_forward.1} parent=1 // pred_region
      %s16 = ssub.s32 12544, 12544
      %17 = vsyncadd [#allocation3], %s16
      %s18 = sshll.u32 [#allocation2], 4
      %s19 = int_to_ptr.vmem [resolvable:$true] %s18
      %24 = dma.hbm_to_vmem [thread:$0]  %s1, 12544, %s19, [#allocation3], 128, 128, 8
    $region9: #{mlp_forward.1} parent=1 // pred_fallthru
      _
    // Predicated region
    $region10: #{mlp_forward.1} parent=1 // pred_check
      _
    $region11: #{mlp_forward.1} parent=1 // pred_check_branch
      %26 = sbr.rel (0) target = $region13
    $region12: #{mlp_forward.1} parent=1 // pred_region
      _
    $region13: #{mlp_forward.1} parent=1 // pred_fallthru
      _
    // Predicated region
    $region14: #{mlp_forward.1} parent=1 // pred_check
      _
    $region15: #{mlp_forward.1} parent=1 // pred_check_branch
      %28 = sbr.rel (0) target = $region17
    $region16: #{mlp_forward.1} parent=1 // pred_region
      _
    $region17: #{mlp_forward.1} parent=1 // pred_fallthru
      _
    // Predicated region
    $region18: #{mlp_forward.1} parent=1 // pred_check
      _
    $region19: #{mlp_forward.1} parent=1 // pred_check_branch
      %30 = sbr.rel (0) target = $region21
    $region20: #{mlp_forward.1} parent=1 // pred_region
      _
    $region21: #{mlp_forward.1} parent=1 // pred_fallthru
      _
    // Predicated region
    $region22: #{mlp_forward.1} parent=1 // pred_check
      _
    $region23: #{mlp_forward.1} parent=1 // pred_check_branch
      %32 = sbr.rel (0) target = $region25
    $region24: #{mlp_forward.1} parent=1 // pred_region
      %33 = dma.done [#allocation3], 12544
    $region25: #{mlp_forward.1} parent=1 // pred_fallthru
      _
    %v35 = vld [vmem:[%s0] sm:$0xff]
    %v36 = vld [vmem:[%s0 + $0x8] sm:$0xff]
    %v37 = vld [vmem:[%s0 + $0x10] sm:$0xff]
    %v38 = vld [vmem:[%s0 + $0x18] sm:$0xf]
    %v39 = vld [vmem:[%s0 + $0x1c] sm:$0xff]
    %v40 = vld [vmem:[%s0 + $0x24] sm:$0xff]
    %v41 = vld [vmem:[%s0 + $0x2c] sm:$0xff]
    %v42 = vld [vmem:[%s0 + $0x34] sm:$0xf]
    %v43 = vld [vmem:[#allocation2] sm:$0xff]
    %v44 = vld [vmem:[#allocation2 + $0x8] sm:$0xff]
    %v45 = vld [vmem:[#allocation2 + $0x10] sm:$0xff]
    %v46 = vld [vmem:[#allocation2 + $0x18] sm:$0xff]
    %v47 = vld [vmem:[#allocation2 + $0x20] sm:$0xff]
    %v48 = vld [vmem:[#allocation2 + $0x28] sm:$0xff]
    %v49 = vld [vmem:[#allocation2 + $0x30] sm:$0xff]
    %v50 = vld [vmem:[#allocation2 + $0x38] sm:$0xff]
    %v51 = vld [vmem:[#allocation2 + $0x40] sm:$0xff]
    %v52 = vld [vmem:[#allocation2 + $0x48] sm:$0xff]
    %v53 = vld [vmem:[#allocation2 + $0x50] sm:$0xff]
    %v54 = vld [vmem:[#allocation2 + $0x58] sm:$0xff]
    %v55 = vld [vmem:[#allocation2 + $0x60] sm:$0xff]
    %v56 = vld [vmem:[#allocation2 + $0x68] sm:$0xff]
    %v57 = vld [vmem:[#allocation2 + $0x70] sm:$0xff]
    %v58 = vld [vmem:[#allocation2 + $0x78] sm:$0xff]
    %v59 = vld [vmem:[#allocation2 + $0x80] sm:$0xff]
    %v60 = vld [vmem:[#allocation2 + $0x88] sm:$0xff]
    %v61 = vld [vmem:[#allocation2 + $0x90] sm:$0xff]
    %v62 = vld [vmem:[#allocation2 + $0x98] sm:$0xff]
    %v63 = vld [vmem:[#allocation2 + $0xa0] sm:$0xff]
    %v64 = vld [vmem:[#allocation2 + $0xa8] sm:$0xff]
    %v65 = vld [vmem:[#allocation2 + $0xb0] sm:$0xff]
    %v66 = vld [vmem:[#allocation2 + $0xb8] sm:$0xff]
    %v67 = vld [vmem:[#allocation2 + $0xc0] sm:$0xff]
    %v68 = vld [vmem:[#allocation2 + $0xc8] sm:$0xff]
    %v69 = vld [vmem:[#allocation2 + $0xd0] sm:$0xff]
    %v70 = vld [vmem:[#allocation2 + $0xd8] sm:$0xff]
    %v71 = vld [vmem:[#allocation2 + $0xe0] sm:$0xff]
    %v72 = vld [vmem:[#allocation2 + $0xe8] sm:$0xff]
    %v73 = vld [vmem:[#allocation2 + $0xf0] sm:$0xff]
    %v74 = vld [vmem:[#allocation2 + $0xf8] sm:$0xff]
    %v75 = vld [vmem:[#allocation2 + $0x100] sm:$0xff]
    %v76 = vld [vmem:[#allocation2 + $0x108] sm:$0xff]
    %v77 = vld [vmem:[#allocation2 + $0x110] sm:$0xff]
    %v78 = vld [vmem:[#allocation2 + $0x118] sm:$0xff]
    %v79 = vld [vmem:[#allocation2 + $0x120] sm:$0xff]
    %v80 = vld [vmem:[#allocation2 + $0x128] sm:$0xff]
    %v81 = vld [vmem:[#allocation2 + $0x130] sm:$0xff]
    %v82 = vld [vmem:[#allocation2 + $0x138] sm:$0xff]
    %v83 = vld [vmem:[#allocation2 + $0x140] sm:$0xff]
    %v84 = vld [vmem:[#allocation2 + $0x148] sm:$0xff]
    %v85 = vld [vmem:[#allocation2 + $0x150] sm:$0xff]
    %v86 = vld [vmem:[#allocation2 + $0x158] sm:$0xff]
    %v87 = vld [vmem:[#allocation2 + $0x160] sm:$0xff]
    %v88 = vld [vmem:[#allocation2 + $0x168] sm:$0xff]
    %v89 = vld [vmem:[#allocation2 + $0x170] sm:$0xff]
    %v90 = vld [vmem:[#allocation2 + $0x178] sm:$0xff]
    %v91 = vld [vmem:[#allocation2 + $0x180] sm:$0xff]
    %v92 = vld [vmem:[#allocation2 + $0x188] sm:$0xff]
    %v93 = vld [vmem:[#allocation2 + $0x190] sm:$0xff]
    %v94 = vld [vmem:[#allocation2 + $0x198] sm:$0xff]
    %v95 = vld [vmem:[#allocation2 + $0x1a0] sm:$0xff]
    %v96 = vld [vmem:[#allocation2 + $0x1a8] sm:$0xff]
    %v97 = vld [vmem:[#allocation2 + $0x1b0] sm:$0xff]
    %v98 = vld [vmem:[#allocation2 + $0x1b8] sm:$0xff]
    %v99 = vld [vmem:[#allocation2 + $0x1c0] sm:$0xff]
    %v100 = vld [vmem:[#allocation2 + $0x1c8] sm:$0xff]
    %v101 = vld [vmem:[#allocation2 + $0x1d0] sm:$0xff]
    %v102 = vld [vmem:[#allocation2 + $0x1d8] sm:$0xff]
    %v103 = vld [vmem:[#allocation2 + $0x1e0] sm:$0xff]
    %v104 = vld [vmem:[#allocation2 + $0x1e8] sm:$0xff]
    %v105 = vld [vmem:[#allocation2 + $0x1f0] sm:$0xff]
    %v106 = vld [vmem:[#allocation2 + $0x1f8] sm:$0xff]
    %v107 = vld [vmem:[#allocation2 + $0x200] sm:$0xff]
    %v108 = vld [vmem:[#allocation2 + $0x208] sm:$0xff]
    %v109 = vld [vmem:[#allocation2 + $0x210] sm:$0xff]
    %v110 = vld [vmem:[#allocation2 + $0x218] sm:$0xff]
    %v111 = vld [vmem:[#allocation2 + $0x220] sm:$0xff]
    %v112 = vld [vmem:[#allocation2 + $0x228] sm:$0xff]
    %v113 = vld [vmem:[#allocation2 + $0x230] sm:$0xff]
    %v114 = vld [vmem:[#allocation2 + $0x238] sm:$0xff]
    %v115 = vld [vmem:[#allocation2 + $0x240] sm:$0xff]
    %v116 = vld [vmem:[#allocation2 + $0x248] sm:$0xff]
    %v117 = vld [vmem:[#allocation2 + $0x250] sm:$0xff]
    %v118 = vld [vmem:[#allocation2 + $0x258] sm:$0xff]
    %v119 = vld [vmem:[#allocation2 + $0x260] sm:$0xff]
    %v120 = vld [vmem:[#allocation2 + $0x268] sm:$0xff]
    %v121 = vld [vmem:[#allocation2 + $0x270] sm:$0xff]
    %v122 = vld [vmem:[#allocation2 + $0x278] sm:$0xff]
    %v123 = vld [vmem:[#allocation2 + $0x280] sm:$0xff]
    %v124 = vld [vmem:[#allocation2 + $0x288] sm:$0xff]
    %v125 = vld [vmem:[#allocation2 + $0x290] sm:$0xff]
    %v126 = vld [vmem:[#allocation2 + $0x298] sm:$0xff]
    %v127 = vld [vmem:[#allocation2 + $0x2a0] sm:$0xff]
    %v128 = vld [vmem:[#allocation2 + $0x2a8] sm:$0xff]
    %v129 = vld [vmem:[#allocation2 + $0x2b0] sm:$0xff]
    %v130 = vld [vmem:[#allocation2 + $0x2b8] sm:$0xff]
    %v131 = vld [vmem:[#allocation2 + $0x2c0] sm:$0xff]
    %v132 = vld [vmem:[#allocation2 + $0x2c8] sm:$0xff]
    %v133 = vld [vmem:[#allocation2 + $0x2d0] sm:$0xff]
    %v134 = vld [vmem:[#allocation2 + $0x2d8] sm:$0xff]
    %v135 = vld [vmem:[#allocation2 + $0x2e0] sm:$0xff]
    %v136 = vld [vmem:[#allocation2 + $0x2e8] sm:$0xff]
    %v137 = vld [vmem:[#allocation2 + $0x2f0] sm:$0xff]
    %v138 = vld [vmem:[#allocation2 + $0x2f8] sm:$0xff]
    %v139 = vld [vmem:[#allocation2 + $0x300] sm:$0xff]
    %v140 = vld [vmem:[#allocation2 + $0x308] sm:$0xff]
    %v141 = vld [vmem:[%s2] sm:$0x3]
    %v143 = vlaneseq
    %v144 = vshrl.u32 %v143, 7
    %v145 = vsub.s32 0, %v144
    %v146 = vrot.slane %v141, %v145
    %v147 = vlaneseq
    %v148 = vshrl.u32 %v147, 7
    %v149 = vsub.s32 1, %v148
    %v150 = vrot.slane %v141, %v149
    %v161 = vunpack.c.l.b16 %v35
    %v162 = vunpack.c.h.b16 %v35
    %v163 = vunpack.c.l.b16 %v36
    %v164 = vunpack.c.h.b16 %v36
    %v165 = vunpack.c.l.b16 %v37
    %v166 = vunpack.c.h.b16 %v37
    %v167 = vunpack.c.l.b16 %v38
    %v168 = vunpack.c.l.b16 %v39
    %v169 = vunpack.c.h.b16 %v39
    %v170 = vunpack.c.l.b16 %v40
    %v171 = vunpack.c.h.b16 %v40
    %v172 = vunpack.c.l.b16 %v41
    %v173 = vunpack.c.h.b16 %v41
    %v174 = vunpack.c.l.b16 %v42
    %v175 = vpack.c.b16 %v168, %v161
    %v176 = vpack.c.b16 %v169, %v162
    %v177 = vpack.c.b16 %v170, %v163
    %v178 = vpack.c.b16 %v171, %v164
    %v179 = vpack.c.b16 %v172, %v165
    %v180 = vpack.c.b16 %v173, %v166
    %v181 = vpack.c.b16 %v174, %v167
    %v286 = vunpack.c.l.b16 %v43
    %v287 = vunpack.c.h.b16 %v43
    %v288 = vunpack.c.l.b16 %v44
    %v289 = vunpack.c.h.b16 %v44
    %v290 = vunpack.c.l.b16 %v45
    %v291 = vunpack.c.h.b16 %v45
    %v292 = vunpack.c.l.b16 %v46
    %v293 = vunpack.c.h.b16 %v46
    %v294 = vunpack.c.l.b16 %v47
    %v295 = vunpack.c.h.b16 %v47
    %v296 = vunpack.c.l.b16 %v48
    %v297 = vunpack.c.h.b16 %v48
    %v298 = vunpack.c.l.b16 %v49
    %v299 = vunpack.c.h.b16 %v49
    %v300 = vunpack.c.l.b16 %v50
    %v301 = vunpack.c.h.b16 %v50
    %v302 = vunpack.c.l.b16 %v51
    %v303 = vunpack.c.h.b16 %v51
    %v304 = vunpack.c.l.b16 %v52
    %v305 = vunpack.c.h.b16 %v52
    %v306 = vunpack.c.l.b16 %v53
    %v307 = vunpack.c.h.b16 %v53
    %v308 = vunpack.c.l.b16 %v54
    %v309 = vunpack.c.h.b16 %v54
    %v310 = vunpack.c.l.b16 %v55
    %v311 = vunpack.c.h.b16 %v55
    %v312 = vunpack.c.l.b16 %v56
    %v313 = vunpack.c.h.b16 %v56
    %v314 = vunpack.c.l.b16 %v57
    %v315 = vunpack.c.h.b16 %v57
    %v316 = vunpack.c.l.b16 %v58
    %v317 = vunpack.c.h.b16 %v58
    %v318 = vunpack.c.l.b16 %v59
    %v319 = vunpack.c.h.b16 %v59
    %v320 = vunpack.c.l.b16 %v60
    %v321 = vunpack.c.h.b16 %v60
    %v322 = vunpack.c.l.b16 %v61
    %v323 = vunpack.c.h.b16 %v61
    %v324 = vunpack.c.l.b16 %v62
    %v325 = vunpack.c.h.b16 %v62
    %v326 = vunpack.c.l.b16 %v63
    %v327 = vunpack.c.h.b16 %v63
    %v328 = vunpack.c.l.b16 %v64
    %v329 = vunpack.c.h.b16 %v64
    %v330 = vunpack.c.l.b16 %v65
    %v331 = vunpack.c.h.b16 %v65
    %v332 = vunpack.c.l.b16 %v66
    %v333 = vunpack.c.h.b16 %v66
    %v334 = vunpack.c.l.b16 %v67
    %v335 = vunpack.c.h.b16 %v67
    %v336 = vunpack.c.l.b16 %v68
    %v337 = vunpack.c.h.b16 %v68
    %v338 = vunpack.c.l.b16 %v69
    %v339 = vunpack.c.h.b16 %v69
    %v340 = vunpack.c.l.b16 %v70
    %v341 = vunpack.c.h.b16 %v70
    %v342 = vunpack.c.l.b16 %v71
    %v343 = vunpack.c.h.b16 %v71
    %v344 = vunpack.c.l.b16 %v72
    %v345 = vunpack.c.h.b16 %v72
    %v346 = vunpack.c.l.b16 %v73
    %v347 = vunpack.c.h.b16 %v73
    %v348 = vunpack.c.l.b16 %v74
    %v349 = vunpack.c.h.b16 %v74
    %v350 = vunpack.c.l.b16 %v75
    %v351 = vunpack.c.h.b16 %v75
    %v352 = vunpack.c.l.b16 %v76
    %v353 = vunpack.c.h.b16 %v76
    %v354 = vunpack.c.l.b16 %v77
    %v355 = vunpack.c.h.b16 %v77
    %v356 = vunpack.c.l.b16 %v78
    %v357 = vunpack.c.h.b16 %v78
    %v358 = vunpack.c.l.b16 %v79
    %v359 = vunpack.c.h.b16 %v79
    %v360 = vunpack.c.l.b16 %v80
    %v361 = vunpack.c.h.b16 %v80
    %v362 = vunpack.c.l.b16 %v81
    %v363 = vunpack.c.h.b16 %v81
    %v364 = vunpack.c.l.b16 %v82
    %v365 = vunpack.c.h.b16 %v82
    %v366 = vunpack.c.l.b16 %v83
    %v367 = vunpack.c.h.b16 %v83
    %v368 = vunpack.c.l.b16 %v84
    %v369 = vunpack.c.h.b16 %v84
    %v370 = vunpack.c.l.b16 %v85
    %v371 = vunpack.c.h.b16 %v85
    %v372 = vunpack.c.l.b16 %v86
    %v373 = vunpack.c.h.b16 %v86
    %v374 = vunpack.c.l.b16 %v87
    %v375 = vunpack.c.h.b16 %v87
    %v376 = vunpack.c.l.b16 %v88
    %v377 = vunpack.c.h.b16 %v88
    %v378 = vunpack.c.l.b16 %v89
    %v379 = vunpack.c.h.b16 %v89
    %v380 = vunpack.c.l.b16 %v90
    %v381 = vunpack.c.h.b16 %v90
    %v382 = vunpack.c.l.b16 %v91
    %v383 = vunpack.c.h.b16 %v91
    %v384 = vunpack.c.l.b16 %v92
    %v385 = vunpack.c.h.b16 %v92
    %v386 = vunpack.c.l.b16 %v93
    %v387 = vunpack.c.h.b16 %v93
    %v388 = vunpack.c.l.b16 %v94
    %v389 = vunpack.c.h.b16 %v94
    %v390 = vunpack.c.l.b16 %v95
    %v391 = vunpack.c.h.b16 %v95
    %v392 = vunpack.c.l.b16 %v96
    %v393 = vunpack.c.h.b16 %v96
    %v394 = vunpack.c.l.b16 %v97
    %v395 = vunpack.c.h.b16 %v97
    %v396 = vunpack.c.l.b16 %v98
    %v397 = vunpack.c.h.b16 %v98
    %v398 = vunpack.c.l.b16 %v99
    %v399 = vunpack.c.h.b16 %v99
    %v400 = vunpack.c.l.b16 %v100
    %v401 = vunpack.c.h.b16 %v100
    %v402 = vunpack.c.l.b16 %v101
    %v403 = vunpack.c.h.b16 %v101
    %v404 = vunpack.c.l.b16 %v102
    %v405 = vunpack.c.h.b16 %v102
    %v406 = vunpack.c.l.b16 %v103
    %v407 = vunpack.c.h.b16 %v103
    %v408 = vunpack.c.l.b16 %v104
    %v409 = vunpack.c.h.b16 %v104
    %v410 = vunpack.c.l.b16 %v105
    %v411 = vunpack.c.h.b16 %v105
    %v412 = vunpack.c.l.b16 %v106
    %v413 = vunpack.c.h.b16 %v106
    %v414 = vunpack.c.l.b16 %v107
    %v415 = vunpack.c.h.b16 %v107
    %v416 = vunpack.c.l.b16 %v108
    %v417 = vunpack.c.h.b16 %v108
    %v418 = vunpack.c.l.b16 %v109
    %v419 = vunpack.c.h.b16 %v109
    %v420 = vunpack.c.l.b16 %v110
    %v421 = vunpack.c.h.b16 %v110
    %v422 = vunpack.c.l.b16 %v111
    %v423 = vunpack.c.h.b16 %v111
    %v424 = vunpack.c.l.b16 %v112
    %v425 = vunpack.c.h.b16 %v112
    %v426 = vunpack.c.l.b16 %v113
    %v427 = vunpack.c.h.b16 %v113
    %v428 = vunpack.c.l.b16 %v114
    %v429 = vunpack.c.h.b16 %v114
    %v430 = vunpack.c.l.b16 %v115
    %v431 = vunpack.c.h.b16 %v115
    %v432 = vunpack.c.l.b16 %v116
    %v433 = vunpack.c.h.b16 %v116
    %v434 = vunpack.c.l.b16 %v117
    %v435 = vunpack.c.h.b16 %v117
    %v436 = vunpack.c.l.b16 %v118
    %v437 = vunpack.c.h.b16 %v118
    %v438 = vunpack.c.l.b16 %v119
    %v439 = vunpack.c.h.b16 %v119
    %v440 = vunpack.c.l.b16 %v120
    %v441 = vunpack.c.h.b16 %v120
    %v442 = vunpack.c.l.b16 %v121
    %v443 = vunpack.c.h.b16 %v121
    %v444 = vunpack.c.l.b16 %v122
    %v445 = vunpack.c.h.b16 %v122
    %v446 = vunpack.c.l.b16 %v123
    %v447 = vunpack.c.h.b16 %v123
    %v448 = vunpack.c.l.b16 %v124
    %v449 = vunpack.c.h.b16 %v124
    %v450 = vunpack.c.l.b16 %v125
    %v451 = vunpack.c.h.b16 %v125
    %v452 = vunpack.c.l.b16 %v126
    %v453 = vunpack.c.h.b16 %v126
    %v454 = vunpack.c.l.b16 %v127
    %v455 = vunpack.c.h.b16 %v127
    %v456 = vunpack.c.l.b16 %v128
    %v457 = vunpack.c.h.b16 %v128
    %v458 = vunpack.c.l.b16 %v129
    %v459 = vunpack.c.h.b16 %v129
    %v460 = vunpack.c.l.b16 %v130
    %v461 = vunpack.c.h.b16 %v130
    %v462 = vunpack.c.l.b16 %v131
    %v463 = vunpack.c.h.b16 %v131
    %v464 = vunpack.c.l.b16 %v132
    %v465 = vunpack.c.h.b16 %v132
    %v466 = vunpack.c.l.b16 %v133
    %v467 = vunpack.c.h.b16 %v133
    %v468 = vunpack.c.l.b16 %v134
    %v469 = vunpack.c.h.b16 %v134
    %v470 = vunpack.c.l.b16 %v135
    %v471 = vunpack.c.h.b16 %v135
    %v472 = vunpack.c.l.b16 %v136
    %v473 = vunpack.c.h.b16 %v136
    %v474 = vunpack.c.l.b16 %v137
    %v475 = vunpack.c.h.b16 %v137
    %v476 = vunpack.c.l.b16 %v138
    %v477 = vunpack.c.h.b16 %v138
    %v478 = vunpack.c.l.b16 %v139
    %v479 = vunpack.c.h.b16 %v139
    %v480 = vunpack.c.l.b16 %v140
    %v481 = vunpack.c.h.b16 %v140
    %v482 = vpack.c.b16 %v288, %v286
    %v483 = vpack.c.b16 %v289, %v287
    %v484 = vpack.c.b16 %v292, %v290
    %v485 = vpack.c.b16 %v293, %v291
    %v486 = vpack.c.b16 %v296, %v294
    %v487 = vpack.c.b16 %v297, %v295
    %v488 = vpack.c.b16 %v300, %v298
    %v489 = vpack.c.b16 %v301, %v299
    %v490 = vpack.c.b16 %v304, %v302
    %v491 = vpack.c.b16 %v305, %v303
    %v492 = vpack.c.b16 %v308, %v306
    %v493 = vpack.c.b16 %v309, %v307
    %v494 = vpack.c.b16 %v312, %v310
    %v495 = vpack.c.b16 %v313, %v311
    %v496 = vpack.c.b16 %v316, %v314
    %v497 = vpack.c.b16 %v317, %v315
    %v498 = vpack.c.b16 %v320, %v318
    %v499 = vpack.c.b16 %v321, %v319
    %v500 = vpack.c.b16 %v324, %v322
    %v501 = vpack.c.b16 %v325, %v323
    %v502 = vpack.c.b16 %v328, %v326
    %v503 = vpack.c.b16 %v329, %v327
    %v504 = vpack.c.b16 %v332, %v330
    %v505 = vpack.c.b16 %v333, %v331
    %v506 = vpack.c.b16 %v336, %v334
    %v507 = vpack.c.b16 %v337, %v335
    %v508 = vpack.c.b16 %v340, %v338
    %v509 = vpack.c.b16 %v341, %v339
    %v510 = vpack.c.b16 %v344, %v342
    %v511 = vpack.c.b16 %v345, %v343
    %v512 = vpack.c.b16 %v348, %v346
    %v513 = vpack.c.b16 %v349, %v347
    %v514 = vpack.c.b16 %v352, %v350
    %v515 = vpack.c.b16 %v353, %v351
    %v516 = vpack.c.b16 %v356, %v354
    %v517 = vpack.c.b16 %v357, %v355
    %v518 = vpack.c.b16 %v360, %v358
    %v519 = vpack.c.b16 %v361, %v359
    %v520 = vpack.c.b16 %v364, %v362
    %v521 = vpack.c.b16 %v365, %v363
    %v522 = vpack.c.b16 %v368, %v366
    %v523 = vpack.c.b16 %v369, %v367
    %v524 = vpack.c.b16 %v372, %v370
    %v525 = vpack.c.b16 %v373, %v371
    %v526 = vpack.c.b16 %v376, %v374
    %v527 = vpack.c.b16 %v377, %v375
    %v528 = vpack.c.b16 %v380, %v378
    %v529 = vpack.c.b16 %v381, %v379
    %v530 = vpack.c.b16 %v384, %v382
    %v531 = vpack.c.b16 %v385, %v383
    %v532 = vpack.c.b16 %v388, %v386
    %v533 = vpack.c.b16 %v389, %v387
    %v534 = vpack.c.b16 %v392, %v390
    %v535 = vpack.c.b16 %v393, %v391
    %v536 = vpack.c.b16 %v396, %v394
    %v537 = vpack.c.b16 %v397, %v395
    %v538 = vpack.c.b16 %v400, %v398
    %v539 = vpack.c.b16 %v401, %v399
    %v540 = vpack.c.b16 %v404, %v402
    %v541 = vpack.c.b16 %v405, %v403
    %v542 = vpack.c.b16 %v408, %v406
    %v543 = vpack.c.b16 %v409, %v407
    %v544 = vpack.c.b16 %v412, %v410
    %v545 = vpack.c.b16 %v413, %v411
    %v546 = vpack.c.b16 %v416, %v414
    %v547 = vpack.c.b16 %v417, %v415
    %v548 = vpack.c.b16 %v420, %v418
    %v549 = vpack.c.b16 %v421, %v419
    %v550 = vpack.c.b16 %v424, %v422
    %v551 = vpack.c.b16 %v425, %v423
    %v552 = vpack.c.b16 %v428, %v426
    %v553 = vpack.c.b16 %v429, %v427
    %v554 = vpack.c.b16 %v432, %v430
    %v555 = vpack.c.b16 %v433, %v431
    %v556 = vpack.c.b16 %v436, %v434
    %v557 = vpack.c.b16 %v437, %v435
    %v558 = vpack.c.b16 %v440, %v438
    %v559 = vpack.c.b16 %v441, %v439
    %v560 = vpack.c.b16 %v444, %v442
    %v561 = vpack.c.b16 %v445, %v443
    %v562 = vpack.c.b16 %v448, %v446
    %v563 = vpack.c.b16 %v449, %v447
    %v564 = vpack.c.b16 %v452, %v450
    %v565 = vpack.c.b16 %v453, %v451
    %v566 = vpack.c.b16 %v456, %v454
    %v567 = vpack.c.b16 %v457, %v455
    %v568 = vpack.c.b16 %v460, %v458
    %v569 = vpack.c.b16 %v461, %v459
    %v570 = vpack.c.b16 %v464, %v462
    %v571 = vpack.c.b16 %v465, %v463
    %v572 = vpack.c.b16 %v468, %v466
    %v573 = vpack.c.b16 %v469, %v467
    %v574 = vpack.c.b16 %v472, %v470
    %v575 = vpack.c.b16 %v473, %v471
    %v576 = vpack.c.b16 %v476, %v474
    %v577 = vpack.c.b16 %v477, %v475
    %v578 = vpack.c.b16 %v480, %v478
    %v579 = vpack.c.b16 %v481, %v479
    %vm678 = vcmask 130048
    %v680 = vsel %vm678, %v181, 0
    %682 = vmatprep.subr.bf16.mxu0 %v483
    %683 = vmatpush1.bf16.msra.mxu0 %v482
    %684 = vmatprep.subr.bf16.mxu0 %v485
    %685 = vmatpush1.bf16.msra.mxu0 %v484
    %686 = vmatprep.subr.bf16.mxu0 %v487
    %687 = vmatpush1.bf16.msra.mxu0 %v486
    %688 = vmatprep.subr.bf16.mxu0 %v489
    %689 = vmatpush1.bf16.msra.mxu0 %v488
    %690 = vmatprep.subr.bf16.mxu0 %v491
    %691 = vmatpush1.bf16.msra.mxu0 %v490
    %692 = vmatprep.subr.bf16.mxu0 %v493
    %693 = vmatpush1.bf16.msra.mxu0 %v492
    %694 = vmatprep.subr.bf16.mxu0 %v495
    %695 = vmatpush1.bf16.msra.mxu0 %v494
    %696 = vmatprep.subr.bf16.mxu0 %v497
    %697 = vmatpush1.bf16.msra.mxu0 %v496
    %698 = vmatprep.subr.bf16.mxu0 %v499
    %699 = vmatpush1.bf16.msra.mxu0 %v498
    %700 = vmatprep.subr.bf16.mxu0 %v501
    %701 = vmatpush1.bf16.msra.mxu0 %v500
    %702 = vmatprep.subr.bf16.mxu0 %v503
    %703 = vmatpush1.bf16.msra.mxu0 %v502
    %704 = vmatprep.subr.bf16.mxu0 %v505
    %705 = vmatpush1.bf16.msra.mxu0 %v504
    %706 = vmatprep.subr.bf16.mxu0 %v507
    %707 = vmatpush1.bf16.msra.mxu0 %v506
    %708 = vmatprep.subr.bf16.mxu0 %v509
    %709 = vmatpush1.bf16.msra.mxu0 %v508
    %710 = vmatprep.subr.bf16.mxu0 %v511
    %711 = vmatpush1.bf16.msra.mxu0 %v510
    %712 = vmatprep.subr.bf16.mxu0 %v513
    %713 = vmatpush1.bf16.msra.mxu0 %v512
    %714 = vmatprep.mubr.bf16.mxu0 %v176
    %715 = vmatmul.mubr.bf16.gmra.mrb[0].mxu0 %v175
    %v716 = vpop.f32.mrb[0].mxu0
    %v717 = vadd.f32 %v146, %v716
    %v718 = vpop.f32.mrb[0].mxu0
    %v719 = vadd.f32 %v150, %v718
    %v720 = vpop.f32.mrb[0].mxu0
    %v721 = vadd.f32 %v146, %v720
    %v722 = vpop.f32.mrb[0].mxu0
    %v723 = vadd.f32 %v150, %v722
    %724 = vdwg.mxu0
    %725 = vmatprep.subr.bf16.mxu0 %v515
    %726 = vmatpush1.bf16.msra.mxu0 %v514
    %727 = vmatprep.subr.bf16.mxu0 %v517
    %728 = vmatpush1.bf16.msra.mxu0 %v516
    %729 = vmatprep.subr.bf16.mxu0 %v519
    %730 = vmatpush1.bf16.msra.mxu0 %v518
    %731 = vmatprep.subr.bf16.mxu0 %v521
    %732 = vmatpush1.bf16.msra.mxu0 %v520
    %733 = vmatprep.subr.bf16.mxu0 %v523
    %734 = vmatpush1.bf16.msra.mxu0 %v522
    %735 = vmatprep.subr.bf16.mxu0 %v525
    %736 = vmatpush1.bf16.msra.mxu0 %v524
    %737 = vmatprep.subr.bf16.mxu0 %v527
    %738 = vmatpush1.bf16.msra.mxu0 %v526
    %739 = vmatprep.subr.bf16.mxu0 %v529
    %740 = vmatpush1.bf16.msra.mxu0 %v528
    %741 = vmatprep.subr.bf16.mxu0 %v531
    %742 = vmatpush1.bf16.msra.mxu0 %v530
    %743 = vmatprep.subr.bf16.mxu0 %v533
    %744 = vmatpush1.bf16.msra.mxu0 %v532
    %745 = vmatprep.subr.bf16.mxu0 %v535
    %746 = vmatpush1.bf16.msra.mxu0 %v534
    %747 = vmatprep.subr.bf16.mxu0 %v537
    %748 = vmatpush1.bf16.msra.mxu0 %v536
    %749 = vmatprep.subr.bf16.mxu0 %v539
    %750 = vmatpush1.bf16.msra.mxu0 %v538
    %751 = vmatprep.subr.bf16.mxu0 %v541
    %752 = vmatpush1.bf16.msra.mxu0 %v540
    %753 = vmatprep.subr.bf16.mxu0 %v543
    %754 = vmatpush1.bf16.msra.mxu0 %v542
    %755 = vmatprep.subr.bf16.mxu0 %v545
    %756 = vmatpush1.bf16.msra.mxu0 %v544
    %757 = vmatprep.mubr.bf16.mxu0 %v178
    %758 = vmatmul.mubr.bf16.gmra.mrb[0].mxu0 %v177
    %v759 = vpop.f32.mrb[0].mxu0
    %v760 = vadd.f32 %v717, %v759
    %v761 = vpop.f32.mrb[0].mxu0
    %v762 = vadd.f32 %v719, %v761
    %v763 = vpop.f32.mrb[0].mxu0
    %v764 = vadd.f32 %v721, %v763
    %v765 = vpop.f32.mrb[0].mxu0
    %v766 = vadd.f32 %v723, %v765
    %767 = vdwg.mxu0
    %768 = vmatprep.subr.bf16.mxu0 %v547
    %769 = vmatpush1.bf16.msra.mxu0 %v546
    %770 = vmatprep.subr.bf16.mxu0 %v549
    %771 = vmatpush1.bf16.msra.mxu0 %v548
    %772 = vmatprep.subr.bf16.mxu0 %v551
    %773 = vmatpush1.bf16.msra.mxu0 %v550
    %774 = vmatprep.subr.bf16.mxu0 %v553
    %775 = vmatpush1.bf16.msra.mxu0 %v552
    %776 = vmatprep.subr.bf16.mxu0 %v555
    %777 = vmatpush1.bf16.msra.mxu0 %v554
    %778 = vmatprep.subr.bf16.mxu0 %v557
    %779 = vmatpush1.bf16.msra.mxu0 %v556
    %780 = vmatprep.subr.bf16.mxu0 %v559
    %781 = vmatpush1.bf16.msra.mxu0 %v558
    %782 = vmatprep.subr.bf16.mxu0 %v561
    %783 = vmatpush1.bf16.msra.mxu0 %v560
    %784 = vmatprep.subr.bf16.mxu0 %v563
    %785 = vmatpush1.bf16.msra.mxu0 %v562
    %786 = vmatprep.subr.bf16.mxu0 %v565
    %787 = vmatpush1.bf16.msra.mxu0 %v564
    %788 = vmatprep.subr.bf16.mxu0 %v567
    %789 = vmatpush1.bf16.msra.mxu0 %v566
    %790 = vmatprep.subr.bf16.mxu0 %v569
    %791 = vmatpush1.bf16.msra.mxu0 %v568
    %792 = vmatprep.subr.bf16.mxu0 %v571
    %793 = vmatpush1.bf16.msra.mxu0 %v570
    %794 = vmatprep.subr.bf16.mxu0 %v573
    %795 = vmatpush1.bf16.msra.mxu0 %v572
    %796 = vmatprep.subr.bf16.mxu0 %v575
    %797 = vmatpush1.bf16.msra.mxu0 %v574
    %798 = vmatprep.subr.bf16.mxu0 %v577
    %799 = vmatpush1.bf16.msra.mxu0 %v576
    %800 = vmatprep.mubr.bf16.mxu0 %v180
    %801 = vmatmul.mubr.bf16.gmra.mrb[0].mxu0 %v179
    %v802 = vpop.f32.mrb[0].mxu0
    %v803 = vadd.f32 %v760, %v802
    %v804 = vpop.f32.mrb[0].mxu0
    %v805 = vadd.f32 %v762, %v804
    %v806 = vpop.f32.mrb[0].mxu0
    %v807 = vadd.f32 %v764, %v806
    %v808 = vpop.f32.mrb[0].mxu0
    %v809 = vadd.f32 %v766, %v808
    %810 = vdwg.mxu0
    %811 = vmatprep.subr.bf16.mxu0 %v579
    %812 = vmatpush1.bf16.msra.mxu0 %v578
    %813 = vmatprep.subr.bf16.mxu0 0
    %814 = vmatpush1.bf16.msra.mxu0 0
    %815 = vmatprep.subr.bf16.mxu0 0
    %816 = vmatpush1.bf16.msra.mxu0 0
    %817 = vmatprep.subr.bf16.mxu0 0
    %818 = vmatpush1.bf16.msra.mxu0 0
    %819 = vmatprep.subr.bf16.mxu0 0
    %820 = vmatpush1.bf16.msra.mxu0 0
    %821 = vmatprep.subr.bf16.mxu0 0
    %822 = vmatpush1.bf16.msra.mxu0 0
    %823 = vmatprep.subr.bf16.mxu0 0
    %824 = vmatpush1.bf16.msra.mxu0 0
    %825 = vmatprep.subr.bf16.mxu0 0
    %826 = vmatpush1.bf16.msra.mxu0 0
    %827 = vmatprep.subr.bf16.mxu0 0
    %828 = vmatpush1.bf16.msra.mxu0 0
    %829 = vmatprep.subr.bf16.mxu0 0
    %830 = vmatpush1.bf16.msra.mxu0 0
    %831 = vmatprep.subr.bf16.mxu0 0
    %832 = vmatpush1.bf16.msra.mxu0 0
    %833 = vmatprep.subr.bf16.mxu0 0
    %834 = vmatpush1.bf16.msra.mxu0 0
    %835 = vmatprep.subr.bf16.mxu0 0
    %836 = vmatpush1.bf16.msra.mxu0 0
    %837 = vmatprep.subr.bf16.mxu0 0
    %838 = vmatpush1.bf16.msra.mxu0 0
    %839 = vmatprep.subr.bf16.mxu0 0
    %840 = vmatpush1.bf16.msra.mxu0 0
    %841 = vmatprep.subr.bf16.mxu0 0
    %842 = vmatpush1.bf16.msra.mxu0 0
    %843 = vmatprep.mubr.bf16.mxu0 0
    %844 = vmatmul.mubr.bf16.gmra.mrb[0].mxu0 %v680
    %v845 = vpop.f32.mrb[0].mxu0
    %v846 = vadd.f32 %v803, %v845
    %v847 = vpop.f32.mrb[0].mxu0
    %v848 = vadd.f32 %v805, %v847
    %v849 = vpop.f32.mrb[0].mxu0
    %v850 = vadd.f32 %v807, %v849
    %v851 = vpop.f32.mrb[0].mxu0
    %v852 = vadd.f32 %v809, %v851
    %853 = vdwg.mxu0
    %v854 = vmax.f32 %v846, 0.0
    %v855 = vmax.f32 %v848, 0.0
    %v856 = vmax.f32 %v850, 0.0
    %v857 = vmax.f32 %v852, 0.0
    %v858 = vpack.c.bf16 %v856, %v854
    %v859 = vpack.c.bf16 %v857, %v855
    %v860 = vld [vmem:[%s3] sm:$0xf]
    %v861 = vld [vmem:[%s3 + $0x4] sm:$0xf]
    %v862 = vld [vmem:[%s3 + $0x8] sm:$0xf]
    %v863 = vld [vmem:[%s3 + $0xc] sm:$0xf]
    %v864 = vld [vmem:[%s3 + $0x10] sm:$0xf]
    %v865 = vld [vmem:[%s3 + $0x14] sm:$0xf]
    %v866 = vld [vmem:[%s3 + $0x18] sm:$0xf]
    %v867 = vld [vmem:[%s3 + $0x1c] sm:$0xf]
    %v868 = vld [vmem:[%s3 + $0x20] sm:$0xf]
    %v869 = vld [vmem:[%s3 + $0x24] sm:$0xf]
    %v870 = vld [vmem:[%s3 + $0x28] sm:$0xf]
    %v871 = vld [vmem:[%s3 + $0x2c] sm:$0xf]
    %v872 = vld [vmem:[%s3 + $0x30] sm:$0xf]
    %v873 = vld [vmem:[%s3 + $0x34] sm:$0xf]
    %v874 = vld [vmem:[%s3 + $0x38] sm:$0xf]
    %v875 = vld [vmem:[%s3 + $0x3c] sm:$0xf]
    %v876 = vld [vmem:[%s3 + $0x40] sm:$0xf]
    %v877 = vld [vmem:[%s3 + $0x44] sm:$0xf]
    %v878 = vld [vmem:[%s3 + $0x48] sm:$0xf]
    %v879 = vld [vmem:[%s3 + $0x4c] sm:$0xf]
    %v880 = vld [vmem:[%s3 + $0x50] sm:$0xf]
    %v881 = vld [vmem:[%s3 + $0x54] sm:$0xf]
    %v882 = vld [vmem:[%s3 + $0x58] sm:$0xf]
    %v883 = vld [vmem:[%s3 + $0x5c] sm:$0xf]
    %v884 = vld [vmem:[%s3 + $0x60] sm:$0xf]
    %v885 = vld [vmem:[%s3 + $0x64] sm:$0xf]
    %v886 = vld [vmem:[%s3 + $0x68] sm:$0xf]
    %v887 = vld [vmem:[%s3 + $0x6c] sm:$0xf]
    %v888 = vld [vmem:[%s3 + $0x70] sm:$0xf]
    %v889 = vld [vmem:[%s3 + $0x74] sm:$0xf]
    %v890 = vld [vmem:[%s3 + $0x78] sm:$0xf]
    %v891 = vld [vmem:[%s3 + $0x7c] sm:$0xf]
    %v892 = vld [vmem:[%s4] sm:$0x1]
    %v894 = vlaneseq
    %v895 = vshrl.u32 %v894, 7
    %v896 = vsub.s32 0, %v895
    %v897 = vrot.slane %v892, %v896
    %v931 = vunpack.c.l.b16 %v860
    %v932 = vunpack.c.l.b16 %v861
    %v933 = vunpack.c.l.b16 %v862
    %v934 = vunpack.c.l.b16 %v863
    %v935 = vunpack.c.l.b16 %v864
    %v936 = vunpack.c.l.b16 %v865
    %v937 = vunpack.c.l.b16 %v866
    %v938 = vunpack.c.l.b16 %v867
    %v939 = vunpack.c.l.b16 %v868
    %v940 = vunpack.c.l.b16 %v869
    %v941 = vunpack.c.l.b16 %v870
    %v942 = vunpack.c.l.b16 %v871
    %v943 = vunpack.c.l.b16 %v872
    %v944 = vunpack.c.l.b16 %v873
    %v945 = vunpack.c.l.b16 %v874
    %v946 = vunpack.c.l.b16 %v875
    %v947 = vunpack.c.l.b16 %v876
    %v948 = vunpack.c.l.b16 %v877
    %v949 = vunpack.c.l.b16 %v878
    %v950 = vunpack.c.l.b16 %v879
    %v951 = vunpack.c.l.b16 %v880
    %v952 = vunpack.c.l.b16 %v881
    %v953 = vunpack.c.l.b16 %v882
    %v954 = vunpack.c.l.b16 %v883
    %v955 = vunpack.c.l.b16 %v884
    %v956 = vunpack.c.l.b16 %v885
    %v957 = vunpack.c.l.b16 %v886
    %v958 = vunpack.c.l.b16 %v887
    %v959 = vunpack.c.l.b16 %v888
    %v960 = vunpack.c.l.b16 %v889
    %v961 = vunpack.c.l.b16 %v890
    %v962 = vunpack.c.l.b16 %v891
    %v963 = vpack.c.b16 %v932, %v931
    %v964 = vpack.c.b16 %v934, %v933
    %v965 = vpack.c.b16 %v936, %v935
    %v966 = vpack.c.b16 %v938, %v937
    %v967 = vpack.c.b16 %v940, %v939
    %v968 = vpack.c.b16 %v942, %v941
    %v969 = vpack.c.b16 %v944, %v943
    %v970 = vpack.c.b16 %v946, %v945
    %v971 = vpack.c.b16 %v948, %v947
    %v972 = vpack.c.b16 %v950, %v949
    %v973 = vpack.c.b16 %v952, %v951
    %v974 = vpack.c.b16 %v954, %v953
    %v975 = vpack.c.b16 %v956, %v955
    %v976 = vpack.c.b16 %v958, %v957
    %v977 = vpack.c.b16 %v960, %v959
    %v978 = vpack.c.b16 %v962, %v961
    %995 = vmatprep.subr.bf16.mxu0 0
    %996 = vmatpush1.bf16.msra.mxu0 %v963
    %997 = vmatprep.subr.bf16.mxu0 0
    %998 = vmatpush1.bf16.msra.mxu0 %v964
    %999 = vmatprep.subr.bf16.mxu0 0
    %1000 = vmatpush1.bf16.msra.mxu0 %v965
    %1001 = vmatprep.subr.bf16.mxu0 0
    %1002 = vmatpush1.bf16.msra.mxu0 %v966
    %1003 = vmatprep.subr.bf16.mxu0 0
    %1004 = vmatpush1.bf16.msra.mxu0 %v967
    %1005 = vmatprep.subr.bf16.mxu0 0
    %1006 = vmatpush1.bf16.msra.mxu0 %v968
    %1007 = vmatprep.subr.bf16.mxu0 0
    %1008 = vmatpush1.bf16.msra.mxu0 %v969
    %1009 = vmatprep.subr.bf16.mxu0 0
    %1010 = vmatpush1.bf16.msra.mxu0 %v970
    %1011 = vmatprep.subr.bf16.mxu0 0
    %1012 = vmatpush1.bf16.msra.mxu0 %v971
    %1013 = vmatprep.subr.bf16.mxu0 0
    %1014 = vmatpush1.bf16.msra.mxu0 %v972
    %1015 = vmatprep.subr.bf16.mxu0 0
    %1016 = vmatpush1.bf16.msra.mxu0 %v973
    %1017 = vmatprep.subr.bf16.mxu0 0
    %1018 = vmatpush1.bf16.msra.mxu0 %v974
    %1019 = vmatprep.subr.bf16.mxu0 0
    %1020 = vmatpush1.bf16.msra.mxu0 %v975
    %1021 = vmatprep.subr.bf16.mxu0 0
    %1022 = vmatpush1.bf16.msra.mxu0 %v976
    %1023 = vmatprep.subr.bf16.mxu0 0
    %1024 = vmatpush1.bf16.msra.mxu0 %v977
    %1025 = vmatprep.subr.bf16.mxu0 0
    %1026 = vmatpush1.bf16.msra.mxu0 %v978
    %1027 = vmatprep.mubr.bf16.mxu0 %v859
    %1028 = vmatmul.mubr.bf16.gmra.mrb[0].mxu0 %v858
    %v1029 = vpop.f32.mrb[0].mxu0
    %v1030 = vadd.f32 %v897, %v1029
    %v1031 = vpop.f32.mrb[0].mxu0
    %v1032 = vpop.f32.mrb[0].mxu0
    %v1033 = vadd.f32 %v897, %v1032
    %v1034 = vpop.f32.mrb[0].mxu0
    %1035 = vdwg.mxu0
    %v1036 = vsub.f32 0.0, %v1030
    %v1037 = vsub.f32 0.0, %v1033
    %v1038 = vmul.f32 %v1036, 1.442695
    %v1039 = vpow.pop %v1038
    %v1040 = vmul.f32 %v1037, 1.442695
    %v1041 = vpow.pop %v1040
    %v1042 = vadd.f32 %v1039, 1.0
    %v1043 = vadd.f32 %v1041, 1.0
    %v1044 = vrcp.pop %v1042
    %v1045 = vrcp.pop %v1043
    %1046 = vst [vmem:[%s5] sm:$0xff] %v1044
    %1047 = vst [vmem:[%s5 + $0x8] sm:$0xff] %v1045
    // Predicated region
    $region26: #{mlp_forward.1} parent=1 // pred_check
      _
    $region27: #{mlp_forward.1} parent=1 // pred_check_branch
      %1049 = sbr.rel (0) target = $region29
    $region28: #{mlp_forward.1} parent=1 // pred_region
      _
    $region29: #{mlp_forward.1} parent=1 // pred_fallthru
      _
    // Predicated region
    $region30: #{mlp_forward.1} parent=1 // pred_check
      _
    $region31: #{mlp_forward.1} parent=1 // pred_check_branch
      %1051 = sbr.rel (0) target = $region33
    $region32: #{mlp_forward.1} parent=1 // pred_region
      _
    $region33: #{mlp_forward.1} parent=1 // pred_fallthru
      _
    %1052 = vsyncpa [#allocation3], 1

</llo_original>
